<compile_context>
chip_gen: v7x
topology: tpu7x:2x2x1
jax: 0.10.0
libtpu: 0.0.40
codegen_flags: <defaults>
</compile_context>

<pallas_src>
import functools

import numpy as np
import jax
import jax.numpy as jnp
from jax import lax
from jax.experimental import pallas as pl
from jax.experimental.pallas import tpu as pltpu

_LANE = 128
_MAX_PACK = 4                       # keep the in-kernel modulator select chain short
_MAX_TB = 2048                      # HBM roofline is reached well before this tile size
_MIN_TB = 8                         # sublane multiple
_VMEM_LIMIT = 48 * 1024 * 1024      # conservative: fits v7x's 64 MiB/TC with headroom


# ---------------------------------------------------------------------------
# Parameter setup (pure numpy, identical math to the PyTorch coupling_matrix)
# ---------------------------------------------------------------------------
def coupling_matrix(gab_prop, Gpar_net):
    gab = np.stack(gab_prop)
    pos = np.unique(gab[:, 0])
    k1 = np.linspace(pos[0] + np.diff(pos[:2]) * Gpar_net['coupl_offset'],
                     pos[-1] - np.diff(pos[:2]) * Gpar_net['coupl_offset'],
                     Gpar_net['Npos'] - Gpar_net['coupl_redfact'])
    orien = np.unique(gab[:, 2])
    k2 = np.linspace(orien[0] + np.diff(orien[:2]) * Gpar_net['coupl_offset'],
                     orien[-1] - np.diff(orien[:2]) * Gpar_net['coupl_offset'],
                     Gpar_net['Norien'] - Gpar_net['coupl_redfact'])
    K = [k1, k1, k2]
    FILTER = []
    PROP = []
    for pp in K[0]:
        for qq in K[1]:
            for oo in K[2]:
                fil = (np.exp(-(gab[:, 0] - pp) ** 2 / (2 * Gpar_net['coupl_sigma'][0] ** 2))
                       * np.exp(-(gab[:, 1] - qq) ** 2 / (2 * Gpar_net['coupl_sigma'][1] ** 2))
                       * np.exp(-(gab[:, 2] - oo) ** 2 / (2 * Gpar_net['coupl_sigma'][2] ** 2)))
                FILTER.append(fil / np.sum(fil))
                PROP.append([pp, qq, oo])
    FILTER = np.stack(FILTER) / np.sum(np.stack(FILTER), axis=0)
    return FILTER, PROP


# ---------------------------------------------------------------------------
# Streaming Pallas kernel: out = exp(x + mod*coupling - c2)   (or x*exp(...))
# inv_ref holds the grid-invariant rows: inv[0]=coupling, inv[1]=varmod*coupling^2/2.
# ---------------------------------------------------------------------------
def _mg_stream_kernel(inv_ref, mod_ref, x_ref, o_ref, *, nonlinearity, pack, seg):
    inv = inv_ref[...]                                   # (2, W) f32, resident
    coup = inv[0:1, :]
    c2 = inv[1:2, :]
    x = x_ref[...].astype(jnp.float32)                   # (TB, W)

    if pack == 1:
        m = mod_ref[...].astype(jnp.float32)             # (TB, 1), lane-broadcast
    else:
        # Packed layout: each 128-lane row holds `pack` original batch rows of
        # (padded) width `seg`.  Expand the (TB, pack) modulators across lane
        # segments with (pack-1) cheap VPU selects (later segments overwrite
        # earlier ones).  pack <= 4 by construction, so this stays well below
        # the HBM-roofline cycle budget.
        lane = lax.broadcasted_iota(jnp.int32, x.shape, 1)
        m = mod_ref[:, 0:1].astype(jnp.float32)
        for p in range(1, pack):
            m = jnp.where(lane >= p * seg,
                          mod_ref[:, p:p + 1].astype(jnp.float32), m)

    gain = m * coup - c2
    # NOTE: on a partial trailing batch tile the out-of-range rows of x/mod are
    # uninitialized VMEM; exp() of that garbage is finite-or-inf junk but is
    # never stored (Pallas clips the out-of-bounds store region).  Safe.
    if nonlinearity:
        y = jnp.exp(x + gain)
    else:
        y = x * jnp.exp(gain)
    o_ref[...] = y.astype(o_ref.dtype)


def _choose_layout(ng):
    """Return (ng_pad, pack, W).

    ng_pad : per-sample feature width after lane padding (>= ng)
    pack   : how many batch rows are packed into one 128-lane row (<= _MAX_PACK)
    W      : kernel last dim = pack * ng_pad, always a multiple of 128
    """
    if ng % _LANE == 0:
        return ng, 1, ng
    if _LANE % ng == 0 and _LANE // ng <= _MAX_PACK:
        return ng, _LANE // ng, _LANE
    for cand in (32, 64):                    # small ng: pad up to a divisor of 128
        if ng <= cand:
            return cand, _LANE // cand, _LANE
    ng_pad = pl.cdiv(ng, _LANE) * _LANE      # large, awkward ng: pad to multiple of 128
    return ng_pad, 1, ng_pad


# ---------------------------------------------------------------------------
# Wrapper: grid-invariant precompute + lane-dense packing + batch tiling
# ---------------------------------------------------------------------------
def mg_target_forward(weight, FILTER, inputs, mod, nonlinearity, varmod=None):
    weight = jnp.asarray(weight, jnp.float32)
    FILTER = jnp.asarray(FILTER, jnp.float32)
    inputs = jnp.asarray(inputs)
    if inputs.dtype not in (jnp.float32, jnp.bfloat16):
        inputs = inputs.astype(jnp.float32)
    B, Ng = inputs.shape

    mod = jnp.asarray(mod, jnp.float32).reshape(-1, 1)   # accept (B,) or (B,1)
    if mod.shape[0] != B:
        raise ValueError(f"mod has {mod.shape[0]} rows, expected batch {B}")

    # --- grid-invariant precompute (tiny; the variance needs the full mod) --
    coupling = jnp.dot(weight ** 2, FILTER)                      # (1, Ng)
    if varmod is None:
        varmod = jnp.var(mod, ddof=1)                            # torch.var default (unbiased)
    varmod = jnp.asarray(varmod, jnp.float32)
    c2 = varmod * coupling ** 2 * 0.5                            # (1, Ng)
    inv = jnp.concatenate([coupling, c2], axis=0)                # (2, Ng) resident rows

    # --- lane-dense layout (never emit masked stores) ------------------------
    ng_pad, pack, W = _choose_layout(Ng)
    if ng_pad != Ng:
        # Zero padding is neutral: padded lanes see coupling = c2 = input = 0.
        inputs = jnp.pad(inputs, ((0, 0), (0, ng_pad - Ng)))
        inv = jnp.pad(inv, ((0, 0), (0, ng_pad - Ng)))

    if pack > 1:
        B_pad = pl.cdiv(B, pack) * pack
        if B_pad != B:
            inputs = jnp.pad(inputs, ((0, B_pad - B), (0, 0)))
            mod = jnp.pad(mod, ((0, B_pad - B), (0, 0)))
        rows = B_pad // pack
        x2 = inputs.reshape(rows, W)          # contiguous row-major reshape: free
        mod2 = mod.reshape(rows, pack)
        inv2 = jnp.tile(inv, (1, pack))       # (2, W)
    else:
        rows = B
        x2, mod2, inv2 = inputs, mod, inv

    in_item = jnp.dtype(x2.dtype).itemsize
    out_item = in_item

    # --- batch tile sizing ----------------------------------------------------
    # Per-row VMEM cost: 3-deep buffered input + output tiles, the lane-padded
    # (TB, pack)->(TB, 128) f32 mod block (also buffered), and ~3 f32 in-kernel
    # temporaries.  Hard-capped at _MAX_TB; HBM roofline is hit long before.
    bytes_per_row = 3 * (W * in_item + W * out_item + _LANE * 4) + 3 * W * 4
    budget = _VMEM_LIMIT - (8 << 20)          # headroom for inv + compiler scratch
    tb_cap = max(_MIN_TB, min(_MAX_TB, (budget // bytes_per_row) // 8 * 8))

    if rows <= _MIN_TB:
        TB = rows                             # single block; block dims == array dims
    else:
        target_steps = 8                      # >= 2 steps/TC on v7x + pipelining room
        tb = ((pl.cdiv(rows, target_steps) + 7) // 8) * 8
        TB = int(max(_MIN_TB, min(tb, tb_cap)))
    n_steps = pl.cdiv(rows, TB)
    grid = (n_steps,)
    mod_cols = mod2.shape[1]

    kernel = functools.partial(_mg_stream_kernel,
                               nonlinearity=bool(nonlinearity),
                               pack=pack, seg=ng_pad)

    cost = pl.CostEstimate(
        flops=int(3 * rows * W),
        transcendentals=int(rows * W),
        bytes_accessed=int(rows * W * (in_item + out_item)
                           + rows * mod_cols * 4 + 2 * W * 4))

    def _run(deep):
        if deep:
            x_spec = pl.BlockSpec((TB, W), lambda i: (i, 0),
                                  pipeline_mode=pl.Buffered(3))
            o_spec = pl.BlockSpec((TB, W), lambda i: (i, 0),
                                  pipeline_mode=pl.Buffered(3))
        else:
            x_spec = pl.BlockSpec((TB, W), lambda i: (i, 0))
            o_spec = pl.BlockSpec((TB, W), lambda i: (i, 0))
        return pl.pallas_call(
            kernel,
            out_shape=jax.ShapeDtypeStruct((rows, W), x2.dtype),
            grid=grid,
            in_specs=[
                pl.BlockSpec((2, W), lambda i: (0, 0)),           # resident invariants
                pl.BlockSpec((TB, mod_cols), lambda i: (i, 0)),   # per-row modulators
                x_spec,                                           # inputs tile
            ],
            out_specs=o_spec,
            compiler_params=pltpu.CompilerParams(
                dimension_semantics=("parallel",),
                vmem_limit_bytes=_VMEM_LIMIT),
            cost_estimate=cost,
        )(inv2, mod2, x2)

    if n_steps >= 3:
        try:
            out2 = _run(True)                 # 3-deep pipeline (v7x: faster HBM)
        except Exception:
            out2 = _run(False)                # fallback: default double-buffering
    else:
        out2 = _run(False)

    # --- undo packing / padding ----------------------------------------------
    if pack > 1:
        out = out2.reshape(-1, ng_pad)[:B, :Ng]
    else:
        out = out2[:, :Ng] if ng_pad != Ng else out2
    return out


# ---------------------------------------------------------------------------
# Pure-JAX reference for validation
# ---------------------------------------------------------------------------
def mg_target_ref(weight, FILTER, inputs, mod, nonlinearity, varmod=None):
    coupling = (weight ** 2) @ FILTER
    if varmod is None:
        varmod = jnp.var(mod, ddof=1)
    gain = mod @ coupling - varmod * coupling ** 2 / 2.0
    return jnp.exp(inputs + gain) if nonlinearity else inputs * jnp.exp(gain)


if __name__ == "__main__":
    # Synthetic gabor population: 4 x-positions, 4 y-positions, 4 orientations
    xs = np.linspace(-1.0, 1.0, 4)
    oriens = np.linspace(0.0, 0.75 * np.pi, 4)
    gab_prop = [np.array([x, y, o], dtype=np.float64)
                for x in xs for y in xs for o in oriens]          # Ng = 64
    Gpar_net = {'Npos': 4, 'Norien': 4, 'coupl_offset': 0.5,
                'coupl_redfact': 1, 'coupl_sigma': [0.5, 0.5, 0.6]}

    FILTER_np, _ = coupling_matrix(gab_prop, Gpar_net)            # [Nf=27, Ng=64]
    Nf, Ng = FILTER_np.shape

    key = jax.random.PRNGKey(0)
    k_w, k_x1, k_m1, k_x4, k_m4, k_f4, k_w4, k_x5, k_m5, k_f3, k_w3, k_x3, k_m3 = (
        jax.random.split(key, 13))

    # Module __init__ uses ones([1, Nf]); perturb so coupling is non-trivial.
    weight = jnp.ones((1, Nf), jnp.float32) + 0.2 * jax.random.normal(k_w, (1, Nf), jnp.float32)
    FILTER = jnp.asarray(FILTER_np, jnp.float32)

    # 1) Ng=64 packed path, partial trailing tile, grid of 3 steps (Buffered path)
    B1 = 36
    inputs1 = 0.1 * jax.random.normal(k_x1, (B1, Ng), jnp.float32)
    mod1 = jax.random.normal(k_m1, (B1, 1), jnp.float32)
    out1 = jax.block_until_ready(
        mg_target_forward(weight, FILTER, inputs1, mod1, nonlinearity=True))
    ref1 = mg_target_ref(weight, FILTER, inputs1, mod1, nonlinearity=True)
    np.testing.assert_allclose(np.asarray(out1), np.asarray(ref1), rtol=1e-4, atol=1e-5)

    # 2) nonlinearity=False, explicit varmod, odd batch (exercises row padding)
    out2 = jax.block_until_ready(
        mg_target_forward(weight, FILTER, inputs1[:5], mod1[:5],
                          nonlinearity=False, varmod=0.3))
    ref2 = mg_target_ref(weight, FILTER, inputs1[:5], mod1[:5],
                         nonlinearity=False, varmod=0.3)
    np.testing.assert_allclose(np.asarray(out2), np.asarray(ref2), rtol=1e-4, atol=1e-5)

    # 3) Ng = 128 (unpacked lane-dense path)
    Ng3, Nf3, B3 = 128, 16, 16
    FILTER3 = jax.random.uniform(k_f3, (Nf3, Ng3), jnp.float32)
    weight3 = jnp.ones((1, Nf3), jnp.float32) + 0.1 * jax.random.normal(k_w3, (1, Nf3), jnp.float32)
    inputs3 = 0.1 * jax.random.normal(k_x3, (B3, Ng3), jnp.float32)
    mod3 = jax.random.normal(k_m3, (B3, 1), jnp.float32)
    out3 = jax.block_until_ready(
        mg_target_forward(weight3, FILTER3, inputs3, mod3, nonlinearity=True))
    ref3 = mg_target_ref(weight3, FILTER3, inputs3, mod3, nonlinearity=True)
    np.testing.assert_allclose(np.asarray(out3), np.asarray(ref3), rtol=1e-4, atol=1e-5)

    # 4) Ng = 100 (neither divisor nor multiple of 128 -> lane padding, no masked stores)
    Ng4, Nf4, B4 = 100, 12, 24
    FILTER4 = jax.random.uniform(k_f4, (Nf4, Ng4), jnp.float32)
    weight4 = jnp.ones((1, Nf4), jnp.float32) + 0.1 * jax.random.normal(k_w4, (1, Nf4), jnp.float32)
    inputs4 = 0.1 * jax.random.normal(k_x4, (B4, Ng4), jnp.float32)
    mod4 = jax.random.normal(k_m4, (B4, 1), jnp.float32)
    out4 = jax.block_until_ready(
        mg_target_forward(weight4, FILTER4, inputs4, mod4, nonlinearity=True))
    ref4 = mg_target_ref(weight4, FILTER4, inputs4, mod4, nonlinearity=True)
    np.testing.assert_allclose(np.asarray(out4), np.asarray(ref4), rtol=1e-4, atol=1e-5)

    # 5) bf16 I/O path (halves HBM traffic); math stays f32 -> loose tolerance
    B5 = 32
    inputs5 = (0.1 * jax.random.normal(k_x5, (B5, Ng), jnp.float32)).astype(jnp.bfloat16)
    mod5 = jax.random.normal(k_m5, (B5, 1), jnp.float32)
    out5 = jax.block_until_ready(
        mg_target_forward(weight, FILTER, inputs5, mod5, nonlinearity=True))
    ref5 = mg_target_ref(weight, FILTER, inputs5.astype(jnp.float32), mod5, nonlinearity=True)
    np.testing.assert_allclose(np.asarray(out5, dtype=np.float32), np.asarray(ref5),
                               rtol=2e-2, atol=2e-2)

    print("KERNEL_OK")
</pallas_src>

<mosaic_0001>
module attributes {stable_mosaic.version = 11 : i64} {
  func.func @_mg_stream_kernel(%arg0: i32, %arg1: memref<2x128xf32, #tpu.memory_space<vmem>>, %arg2: memref<8x2xf32, #tpu.memory_space<vmem>>, %arg3: memref<8x128xf32, #tpu.memory_space<vmem>>, %arg4: memref<8x128xf32, #tpu.memory_space<vmem>>) attributes {dimension_semantics = [#tpu.dimension_semantics<parallel>], iteration_bounds = array<i64: 3>, scalar_prefetch = 0 : i64, scratch_operands = 0 : i64, tpu.core_type = #tpu.core_type<tc>, window_params = [{pipeline_mode = #tpu.pipeline_mode<synchronous>, transform_indices = @transform_0, window_bounds = array<i64: 2, 128>}, {transform_indices = @transform_1, window_bounds = array<i64: 8, 2>}, {transform_indices = @transform_2, window_bounds = array<i64: 8, 128>}, {transform_indices = @transform_3, window_bounds = array<i64: 8, 128>}]} {
    %c0 = arith.constant 0 : index
    %c0_0 = arith.constant 0 : index
    %0 = vector.load %arg1[%c0, %c0_0] : memref<2x128xf32, #tpu.memory_space<vmem>>, vector<2x128xf32>
    %1 = vector.extract_strided_slice %0 {offsets = [0, 0], sizes = [1, 128], strides = [1, 1]} : vector<2x128xf32> to vector<1x128xf32>
    %2 = vector.extract_strided_slice %0 {offsets = [1, 0], sizes = [1, 128], strides = [1, 1]} : vector<2x128xf32> to vector<1x128xf32>
    %c0_1 = arith.constant 0 : index
    %c0_2 = arith.constant 0 : index
    %3 = vector.load %arg3[%c0_1, %c0_2] : memref<8x128xf32, #tpu.memory_space<vmem>>, vector<8x128xf32>
    %4 = tpu.iota {dimensions = array<i32: 1>} : vector<8x128xi32>
    %c0_3 = arith.constant 0 : index
    %c0_4 = arith.constant 0 : index
    %5 = vector.load %arg2[%c0_3, %c0_4] : memref<8x2xf32, #tpu.memory_space<vmem>>, vector<8x1xf32>
    %c64_i32 = arith.constant 64 : i32
    %6 = vector.broadcast %c64_i32 : i32 to vector<8x128xi32>
    %7 = arith.cmpi sge, %4, %6 : vector<8x128xi32>
    %c0_5 = arith.constant 0 : index
    %c1 = arith.constant 1 : index
    %8 = vector.load %arg2[%c0_5, %c1] : memref<8x2xf32, #tpu.memory_space<vmem>>, vector<8x1xf32>
    %9 = vector.shape_cast %8 : vector<8x1xf32> to vector<8x1xf32>
    %10 = vector.broadcast %9 : vector<8x1xf32> to vector<8x128xf32>
    %11 = vector.shape_cast %5 : vector<8x1xf32> to vector<8x1xf32>
    %12 = vector.broadcast %11 : vector<8x1xf32> to vector<8x128xf32>
    %13 = arith.select %7, %10, %12 : vector<8x128xi1>, vector<8x128xf32>
    %14 = vector.broadcast %1 : vector<1x128xf32> to vector<8x128xf32>
    %15 = arith.mulf %13, %14 : vector<8x128xf32>
    %16 = vector.broadcast %2 : vector<1x128xf32> to vector<8x128xf32>
    %17 = arith.subf %15, %16 : vector<8x128xf32>
    %18 = arith.addf %3, %17 : vector<8x128xf32>
    %19 = math.exp %18 : vector<8x128xf32>
    %c0_6 = arith.constant 0 : index
    %c0_7 = arith.constant 0 : index
    %20 = vector.load %arg4[%c0_6, %c0_7] : memref<8x128xf32, #tpu.memory_space<vmem>>, vector<8x128xf32>
    tpu.vector_store %arg4[%c0_6, %c0_7], %19 {strides = array<i32>} : memref<8x128xf32, #tpu.memory_space<vmem>>, vector<8x128xf32>,
    return
  }
  func.func @transform_0(%arg0: i32) -> (i32, i32) {
    %c0_i32 = arith.constant 0 : i32
    %c0_i32_0 = arith.constant 0 : i32
    %c0_i32_1 = arith.constant 0 : i32
    return %c0_i32, %c0_i32_0 : i32, i32
  }
  func.func @transform_1(%arg0: i32) -> (i32, i32) {
    %c0_i32 = arith.constant 0 : i32
    %c0_i32_0 = arith.constant 0 : i32
    return %arg0, %c0_i32 : i32, i32
  }
  func.func @transform_2(%arg0: i32) -> (i32, i32) {
    %c0_i32 = arith.constant 0 : i32
    %c0_i32_0 = arith.constant 0 : i32
    return %arg0, %c0_i32 : i32, i32
  }
  func.func @transform_3(%arg0: i32) -> (i32, i32) {
    %c0_i32 = arith.constant 0 : i32
    %c0_i32_0 = arith.constant 0 : i32
    return %arg0, %c0_i32 : i32, i32
  }
}

</mosaic_0001>

<llo_original>
// kernel: tpu_custom_call.1
$region0: #{tpu_custom_call.1}
  #allocation0 [shape = 'u32[]', space=smem, size = 0x4, offset = 0x4, fixed_abs, tag = 'smem constant byte address 0x4 - core index']
  #allocation1 [shape = 'u32[144,128]{1,0:T(1,128)}', space=vmem, size = 0x12000, scoped, tag = 'internal scratch']
  %s0 = inlined_call_operand.vmem [shape: f32[2,128], index: 0, kind: input, shape index: {}]
  %s1 = inlined_call_operand.vmem [shape: f32[18,2], index: 1, kind: input, shape index: {}]
  %s2 = inlined_call_operand.vmem [shape: f32[18,128], index: 2, kind: input, shape index: {}]
  %s3 = inlined_call_operand.hbm [shape: f32[18,128], index: 3, kind: output, shape index: {}]
  %s4 = sld [smem:[#allocation0]]
  $region45: #{tpu_custom_call.1} parent=0
    _
  %s6 = ssub.s32 1, %s4
  %s7 = scalar_select 0, %s6, %s4
  $region1: #{tpu_custom_call.1} parent=0
    #allocation2 [shape = 'u8[8192]{0}', space=vmem, size = 0x2000, scoped, tag = 'output window, operand 0']
    #allocation3 [shape = 's32[2]{0}', space=sflag, size = 0x8, scoped, tag = 'scoped memory for tpu_custom_call.1']
    %8 = vsyncpa [#allocation3], 0
    %s9 = scalar_lea.sflag [#allocation3], 1
    %10 = vsyncpa %s9, 0
    loop: start=0, step=1, limit=5
    $region2: #{tpu_custom_call.1} parent=1 // loop_pre_header
      _
    $region3: #{tpu_custom_call.1} parent=1 // loop_header
      %s12 = sphi 0, %s16
      %p13 = scmp.ge.s32.totalorder %s12, 5
      %s20 = sphi 0, %s20
      %s22 = sphi 0, %s20
      %s23 = sphi 0, %s22
      %s37 = sphi 0, %s23
      %s43 = sphi 0, %s45
      %s46 = sphi 0, %s43
      %s47 = sphi 0, %s46
      %s63 = sphi 0, %s47
      %s69 = sphi 0, %s71
      %s72 = sphi 0, %s69
      %s73 = sphi 0, %s72
      %s89 = sphi 0, %s73
      %s95 = sphi 0, %s97
      %s98 = sphi 0, %s95
      %s99 = sphi 0, %s98
      %s115 = sphi 0, %s99
    $region4: #{tpu_custom_call.1} parent=1 // loop_header_branch
      %15 = sbr.rel (%p13) target = $region8
    $region5: #{tpu_custom_call.1} parent=1 // loop_body
      %s17 = ssub.s32 %s12, 1
      %s18 = ssub.s32 %s12, 2
      %s19 = sadd.s32 %s12, 1
      %s21 = sadd.s32 %s20, 1
      %p24 = scmp.eq.s32.totalorder %s12, 2
      %p25 = scmp.ne.s32.totalorder %s20, %s22
      %p26 = scmp.eq.s32.totalorder %s12, 0
      %p27 = por %p25, %p26
      %p28 = scmp.ne.s32.totalorder %s20, %s22
      %p29 = scmp.eq.s32.totalorder %s17, 2
      %p30 = por %p28, %p29
      %p31 = scmp.ne.s32.totalorder %s22, %s23
      %p32 = scmp.eq.s32.totalorder %s17, 0
      %p33 = por %p31, %p32
      %p34 = scmp.ne.s32.totalorder %s22, %s23
      %p35 = scmp.eq.s32.totalorder %s18, 2
      %p36 = por %p34, %p35
      %p38 = scmp.ne.s32.totalorder %s23, %s37
      %p39 = scmp.eq.s32.totalorder %s18, 0
      %p40 = por %p38, %p39
      %s41 = ssub.s32 %s12, %s19
      %p42 = scmp.eq.s32.totalorder %s41, 0
      %s44 = sadd.s32 %s43, 1
      %s45 = scalar_select %p42, %s43, %s44
      %p48 = pneg %p42
      %p49 = scmp.eq.s32.totalorder %s12, 2
      %p50 = por %p48, %p49
      %p51 = scmp.ne.s32.totalorder %s43, %s46
      %p52 = scmp.eq.s32.totalorder %s12, 0
      %p53 = por %p51, %p52
      %p54 = scmp.ne.s32.totalorder %s43, %s46
      %p55 = scmp.eq.s32.totalorder %s17, 2
      %p56 = por %p54, %p55
      %p57 = scmp.ne.s32.totalorder %s46, %s47
      %p58 = scmp.eq.s32.totalorder %s17, 0
      %p59 = por %p57, %p58
      %p60 = scmp.ne.s32.totalorder %s46, %s47
      %p61 = scmp.eq.s32.totalorder %s18, 2
      %p62 = por %p60, %p61
      %p64 = scmp.ne.s32.totalorder %s47, %s63
      %p65 = scmp.eq.s32.totalorder %s18, 0
      %p66 = por %p64, %p65
      %s67 = ssub.s32 %s12, %s19
      %p68 = scmp.eq.s32.totalorder %s67, 0
      %s70 = sadd.s32 %s69, 1
      %s71 = scalar_select %p68, %s69, %s70
      %p74 = pneg %p68
      %p75 = scmp.eq.s32.totalorder %s12, 2
      %p76 = por %p74, %p75
      %p77 = scmp.ne.s32.totalorder %s69, %s72
      %p78 = scmp.eq.s32.totalorder %s12, 0
      %p79 = por %p77, %p78
      %p80 = scmp.ne.s32.totalorder %s69, %s72
      %p81 = scmp.eq.s32.totalorder %s17, 2
      %p82 = por %p80, %p81
      %p83 = scmp.ne.s32.totalorder %s72, %s73
      %p84 = scmp.eq.s32.totalorder %s17, 0
      %p85 = por %p83, %p84
      %p86 = scmp.ne.s32.totalorder %s72, %s73
      %p87 = scmp.eq.s32.totalorder %s18, 2
      %p88 = por %p86, %p87
      %p90 = scmp.ne.s32.totalorder %s73, %s89
      %p91 = scmp.eq.s32.totalorder %s18, 0
      %p92 = por %p90, %p91
      %s93 = ssub.s32 %s12, %s19
      %p94 = scmp.eq.s32.totalorder %s93, 0
      %s96 = sadd.s32 %s95, 1
      %s97 = scalar_select %p94, %s95, %s96
      %p100 = pneg %p94
      %p101 = scmp.eq.s32.totalorder %s12, 2
      %p102 = por %p100, %p101
      %p103 = scmp.ne.s32.totalorder %s95, %s98
      %p104 = scmp.eq.s32.totalorder %s12, 0
      %p105 = por %p103, %p104
      %p106 = scmp.ne.s32.totalorder %s95, %s98
      %p107 = scmp.eq.s32.totalorder %s17, 2
      %p108 = por %p106, %p107
      %p109 = scmp.ne.s32.totalorder %s98, %s99
      %p110 = scmp.eq.s32.totalorder %s17, 0
      %p111 = por %p109, %p110
      %p112 = scmp.ne.s32.totalorder %s98, %s99
      %p113 = scmp.eq.s32.totalorder %s18, 2
      %p114 = por %p112, %p113
      %p116 = scmp.ne.s32.totalorder %s99, %s115
      %p117 = scmp.eq.s32.totalorder %s18, 0
      %p118 = por %p116, %p117
      %p119 = scmp.le.s32.totalorder 1, %s12
      %p120 = scmp.lt.s32.totalorder %s12, 4
      %p121 = pnand %p119, %p120
      %p122 = pneg %p121
      // Predicated region
      $region9: #{tpu_custom_call.1} parent=5 // pred_check
        _
      $region10: #{tpu_custom_call.1} parent=5 // pred_check_branch
        %124 = sbr.rel (%p121) target = $region12
      $region11: #{tpu_custom_call.1} parent=5 // pred_region
        %s125 = ssub.s32 %s12, 1
        // Predicated region
        $region13: #{tpu_custom_call.1} parent=11 // pred_check
          %p126 = pneg %p33
        $region14: #{tpu_custom_call.1} parent=11 // pred_check_branch
          %128 = sbr.rel (%p126) target = $region16
        $region15: #{tpu_custom_call.1} parent=11 // pred_region
          _
        $region16: #{tpu_custom_call.1} parent=11 // pred_fallthru
          _
      $region12: #{tpu_custom_call.1} parent=5 // pred_fallthru
        _
      %p129 = scmp.lt.s32.totalorder %s12, 3
      // Predicated region
      $region17: #{tpu_custom_call.1} parent=5 // pred_check
        %p130 = pneg %p129
      $region18: #{tpu_custom_call.1} parent=5 // pred_check_branch
        %132 = sbr.rel (%p130) target = $region20
      $region19: #{tpu_custom_call.1} parent=5 // pred_region
        // Predicated region
        $region21: #{tpu_custom_call.1} parent=19 // pred_check
          %p133 = pneg %p53
        $region22: #{tpu_custom_call.1} parent=19 // pred_check_branch
          %135 = sbr.rel (%p133) target = $region24
        $region23: #{tpu_custom_call.1} parent=19 // pred_region
          %p136 = scmp.lt.s32.totalorder %s12, 2
          %s137 = scalar_select %p136, %s12, 2
          %s138 = smul.addr %s137, 8
          %s139 = scalar_lea.vmem %s1, %s138
        $region24: #{tpu_custom_call.1} parent=19 // pred_fallthru
          _
        // Predicated region
        $region25: #{tpu_custom_call.1} parent=19 // pred_check
          %p140 = pneg %p79
        $region26: #{tpu_custom_call.1} parent=19 // pred_check_branch
          %142 = sbr.rel (%p140) target = $region28
        $region27: #{tpu_custom_call.1} parent=19 // pred_region
          %p143 = scmp.lt.s32.totalorder %s12, 2
          %s144 = scalar_select %p143, %s12, 2
          %s145 = smul.addr %s144, 8
          %s146 = scalar_lea.vmem %s2, %s145
        $region28: #{tpu_custom_call.1} parent=19 // pred_fallthru
          _
      $region20: #{tpu_custom_call.1} parent=5 // pred_fallthru
        _
      %p147 = scmp.le.s32.totalorder 1, %s12
      %p148 = scmp.lt.s32.totalorder %s12, 4
      %p149 = pnand %p147, %p148
      %p150 = pneg %p149
      // Predicated region
      $region29: #{tpu_custom_call.1} parent=5 // pred_check
        _
      $region30: #{tpu_custom_call.1} parent=5 // pred_check_branch
        %152 = sbr.rel (%p149) target = $region32
      $region31: #{tpu_custom_call.1} parent=5 // pred_region
        %s153 = ssub.s32 %s12, 1
        %p154 = pneg %p33
        %p155 = pneg %p30
        %p156 = scmp.lt.s32.totalorder %s17, 2
        %s157 = scalar_select %p156, %s17, 2
        %s158 = smul.addr %s157, 8
        %s159 = scalar_lea.vmem %s1, %s158
        %p160 = pneg %p59
        %p161 = pneg %p56
        %p162 = scmp.lt.s32.totalorder %s17, 2
        %s163 = scalar_select %p162, %s17, 2
        %s164 = smul.addr %s163, 8
        %s165 = scalar_lea.vmem %s2, %s164
        %p166 = pneg %p85
        %p167 = pneg %p82
        %p168 = pneg %p111
        %p169 = pneg %p108
        %s170 = sand.u32 %s98, 1
        %s171 = scalar_lea.sflag [#allocation3], %s170
        %s172 = sand.u32 %s98, 1
        %s173 = smul.addr %s172, 8
        %s174 = scalar_lea.vmem [#allocation2], %s173
        %p175 = scmp.lt.s32.totalorder %s17, 2
        %s176 = scalar_select %p175, %s17, 2
        %s177 = smul.addr %s176, 8
        %s178 = scalar_lea.vmem %s1, %s177
        %p179 = scmp.lt.s32.totalorder %s17, 2
        %s180 = scalar_select %p179, %s17, 2
        %s181 = smul.addr %s180, 8
        %s182 = scalar_lea.vmem %s2, %s181
        %v183 = vld [vmem:[%s0] sm:$0x3]
        %v184 = vld [vmem:[%s182] sm:$0xff]
        %v185 = vlaneseq
        %v186 = vand.u32 %v185, 127
        %v187 = vld [vmem:[%s178] sm:$0xff]
        %vm188 = vcmp.ge.s32.totalorder %v186, 64
        %190 = vset.pattern.permute.xlu0 1
        %191 = vperm.xlu0 %190, %v187
        %v192 = vpop.permute.xlu0 %191
        %194 = vset.pattern.permute.xlu0 0
        %195 = vperm.xlu0 %194, %v187
        %v196 = vpop.permute.xlu0 %195
        %v198 = vsel %vm188, %v192, %v196
        %v199 = vlaneseq
        %v200 = vshrl.u32 %v199, 7
        %v201 = vsub.s32 0, %v200
        %v202 = vrot.slane %v183, %v201
        %v203 = vmul.f32 %v198, %v202
        %v204 = vlaneseq
        %v205 = vshrl.u32 %v204, 7
        %v206 = vsub.s32 1, %v205
        %v207 = vrot.slane %v183, %v206
        %v208 = vsub.f32 %v203, %v207
        %v209 = vadd.f32 %v184, %v208
        %v210 = vmul.f32 %v209, 1.442695
        %v211 = vpow.pop %v210
        %212 = vst [vmem:[%s174] sm:$0xff] %v211
        %s213 = sand.u32 %s98, 1
        %s214 = scalar_lea.sflag [#allocation3], %s213
        %s215 = sand.u32 %s98, 1
        %s216 = smul.addr %s215, 8
        %s217 = scalar_lea.vmem [#allocation2], %s216
        // Predicated region
        $region33: #{tpu_custom_call.1} parent=31 // pred_check
          %p218 = pneg %p108
        $region34: #{tpu_custom_call.1} parent=31 // pred_check_branch
          %220 = sbr.rel (%p218) target = $region36
        $region35: #{tpu_custom_call.1} parent=31 // pred_region
          %s222 = ssub.s32 128, 128
          %223 = vsyncadd %s214, %s222
          %s224 = smul.addr %s17, 128
          %s225 = scalar_lea.hbm %s3, %s224
          %s227 = sshll.u32 %s217, 4
          %s228 = int_to_ptr.vmem [resolvable:$true] %s227
          %230 = dma.vmem_to_hbm [thread:$0]  %s228, 128, %s225, %s214
        $region36: #{tpu_custom_call.1} parent=31 // pred_fallthru
          _
      $region32: #{tpu_custom_call.1} parent=5 // pred_fallthru
        _
      %p231 = scmp.le.s32.totalorder 2, %s12
      // Predicated region
      $region37: #{tpu_custom_call.1} parent=5 // pred_check
        %p232 = pneg %p231
      $region38: #{tpu_custom_call.1} parent=5 // pred_check_branch
        %234 = sbr.rel (%p232) target = $region40
      $region39: #{tpu_custom_call.1} parent=5 // pred_region
        %s235 = ssub.s32 %s12, 2
        // Predicated region
        $region41: #{tpu_custom_call.1} parent=39 // pred_check
          %p236 = pneg %p114
        $region42: #{tpu_custom_call.1} parent=39 // pred_check_branch
          %238 = sbr.rel (%p236) target = $region44
        $region43: #{tpu_custom_call.1} parent=39 // pred_region
          %s239 = sand.u32 %s99, 1
          %s240 = scalar_lea.sflag [#allocation3], %s239
          %s241 = sand.u32 %s99, 1
          %s242 = smul.addr %s241, 8
          %s243 = scalar_lea.vmem [#allocation2], %s242
          %244 = dma.done %s240, 128
        $region44: #{tpu_custom_call.1} parent=39 // pred_fallthru
          _
      $region40: #{tpu_custom_call.1} parent=5 // pred_fallthru
        _
    $region6: #{tpu_custom_call.1} parent=1 // loop_footer
      %s16 = sadd.s32 1, %s12
    $region7: #{tpu_custom_call.1} parent=1 // loop_footer_branch
      %11 = sbr.rel target = $region3
    $region8: #{tpu_custom_call.1} parent=1 // loop_exit
      _
    %245 = vsyncpa [#allocation3], 1
    %s246 = scalar_lea.sflag [#allocation3], 1
    %247 = vsyncpa %s246, 1

</llo_original>
